<compile_context>
chip_gen: v6e
topology: v6e:2x2x1
jax: 0.10.0
libtpu: 0.0.40
codegen_flags: <defaults>
</compile_context>

<pallas_src>
import jax
import jax.numpy as jnp
import numpy as np
from jax import lax
from jax.experimental import pallas as pl
from jax.experimental.pallas import tpu as pltpu

HIDDEN = 64


def lstm_kernel(x_ref, w_ref, b_ref, h_out_ref):
    """x_ref: (T, B, I); w_ref: (I+H, 4H) gate-reordered [i,f,o,g];
    b_ref: (1, 4H); h_out_ref: (B, H) = h at the last time step."""
    T, B, _ = x_ref.shape
    H = h_out_ref.shape[1]

    # Hoist weight / bias loads out of the recurrence.
    w = w_ref[...]                       # (I+H, 4H)
    b = b_ref[...]                       # (1, 4H)

    def step(t, carry):
        h, c = carry                     # (B, H), (B, H) -- loop-carried vregs
        x_t = x_ref[t]                   # (B, I)
        xh = jnp.concatenate([x_t, h], axis=1)              # (B, I+H)
        gates = jnp.dot(xh, w, preferred_element_type=jnp.float32) + b  # (B,4H)

        # Gate layout after wrapper-side column permutation: [i, f, o, g].
        sig = jax.nn.sigmoid(gates[:, 0:3 * H])              # contiguous (B,3H)
        i_g = sig[:, 0 * H:1 * H]
        f_g = sig[:, 1 * H:2 * H]
        o_g = sig[:, 2 * H:3 * H]
        g_g = jnp.tanh(gates[:, 3 * H:4 * H])                # trailing (B,H)

        c_new = f_g * c + i_g * g_g
        h_new = o_g * jnp.tanh(c_new)
        return (h_new, c_new)

    h0 = jnp.zeros((B, H), jnp.float32)
    c0 = jnp.zeros((B, H), jnp.float32)
    h_last, _ = lax.fori_loop(0, T, step, (h0, c0), unroll=True)
    h_out_ref[...] = h_last


def lstm_forward(x, params):
    """x: (B, T, I) float32. Returns (price (B,1), direction (B,1))."""
    B, T, I = x.shape
    H = HIDDEN

    # Fused gate weight: rows = [W_ih^T ; W_hh^T]  -> (I+H, 4H).
    w_cat = jnp.concatenate([params["w_ih"].T, params["w_hh"].T], axis=0)
    bias = (params["b_ih"] + params["b_hh"]).reshape(1, 4 * H)

    # Reorder gate columns from PyTorch [i, f, g, o] to [i, f, o, g] so the
    # kernel applies sigmoid to one contiguous 3H slice and tanh to the last H.
    def reorder_gates(m):
        return jnp.concatenate(
            [m[..., 0:2 * H], m[..., 3 * H:4 * H], m[..., 2 * H:3 * H]],
            axis=-1)

    w_cat = reorder_gates(w_cat)                       # (I+H, 4H)
    bias = reorder_gates(bias)                         # (1, 4H)

    x_tbi = jnp.transpose(x, (1, 0, 2))                # (T, B, I)

    h_last = pl.pallas_call(
        lstm_kernel,
        out_shape=jax.ShapeDtypeStruct((B, H), jnp.float32),
        grid_spec=pltpu.PrefetchScalarGridSpec(
            num_scalar_prefetch=0,
            grid=(1,),
            in_specs=[
                pl.BlockSpec((T, B, I), lambda i: (0, 0, 0)),      # whole seq
                pl.BlockSpec((I + H, 4 * H), lambda i: (0, 0)),    # fused W
                pl.BlockSpec((1, 4 * H), lambda i: (0, 0)),        # fused bias
            ],
            out_specs=pl.BlockSpec((B, H), lambda i: (0, 0)),
        ),
        compiler_params=pltpu.CompilerParams(
            dimension_semantics=("arbitrary",)),
    )(x_tbi, w_cat, bias)

    # Tiny (H, 2) heads: cheaper as plain XLA matmuls than as in-kernel
    # 2-lane-wide masked stores.
    price = h_last @ params["fc_price_w"].T + params["fc_price_b"]
    direction = h_last @ params["fc_dir_w"].T + params["fc_dir_b"]
    return price, direction


def lstm_reference(x, params):
    """Pure-JAX reference matching nn.LSTM + Linear semantics."""
    B, T, I = x.shape
    H = HIDDEN
    w_ih, w_hh = params["w_ih"], params["w_hh"]
    b = params["b_ih"] + params["b_hh"]

    def step(carry, x_t):
        h, c = carry
        gates = x_t @ w_ih.T + h @ w_hh.T + b
        i = jax.nn.sigmoid(gates[:, 0 * H:1 * H])
        f = jax.nn.sigmoid(gates[:, 1 * H:2 * H])
        g = jnp.tanh(gates[:, 2 * H:3 * H])
        o = jax.nn.sigmoid(gates[:, 3 * H:4 * H])
        c = f * c + i * g
        h = o * jnp.tanh(c)
        return (h, c), h

    h0 = jnp.zeros((B, H), jnp.float32)
    c0 = jnp.zeros((B, H), jnp.float32)
    (h_last, _), _ = jax.lax.scan(step, (h0, c0), jnp.transpose(x, (1, 0, 2)))
    price = h_last @ params["fc_price_w"].T + params["fc_price_b"]
    direction = h_last @ params["fc_dir_w"].T + params["fc_dir_b"]
    return price, direction


def init_params(key, input_size, hidden_size):
    """Deterministic init matching nn.LSTM / nn.Linear parameter shapes."""
    ks = jax.random.split(key, 8)
    k_lstm = 1.0 / np.sqrt(hidden_size)
    u = lambda k, shape, bound: jax.random.uniform(
        k, shape, jnp.float32, -bound, bound)
    return {
        "w_ih": u(ks[0], (4 * hidden_size, input_size), k_lstm),
        "w_hh": u(ks[1], (4 * hidden_size, hidden_size), k_lstm),
        "b_ih": u(ks[2], (4 * hidden_size,), k_lstm),
        "b_hh": u(ks[3], (4 * hidden_size,), k_lstm),
        "fc_price_w": u(ks[4], (1, hidden_size), k_lstm),
        "fc_price_b": u(ks[5], (1,), k_lstm),
        "fc_dir_w": u(ks[6], (1, hidden_size), k_lstm),
        "fc_dir_b": u(ks[7], (1,), k_lstm),
    }


if __name__ == "__main__":
    key = jax.random.PRNGKey(0)
    k_x, k_p = jax.random.split(key)

    B, T, I = 2, 8, 16          # batch, seq, input_size (x.shape[2] == 16)
    x = jax.random.normal(k_x, (B, T, I), jnp.float32)
    params = init_params(k_p, I, HIDDEN)

    price, direction = jax.jit(lstm_forward)(x, params)
    jax.block_until_ready((price, direction))

    ref_price, ref_dir = lstm_reference(x, params)
    np.testing.assert_allclose(np.asarray(price), np.asarray(ref_price),
                               rtol=1e-5, atol=1e-5)
    np.testing.assert_allclose(np.asarray(direction), np.asarray(ref_dir),
                               rtol=1e-5, atol=1e-5)

    assert price.shape == (B, 1) and direction.shape == (B, 1)
    print("KERNEL_OK")
</pallas_src>

<mosaic_0001>
module attributes {stable_mosaic.version = 11 : i64} {
  func.func @lstm_kernel(%arg0: i32, %arg1: memref<8x2x16xf32, #tpu.memory_space<vmem>>, %arg2: memref<80x256xf32, #tpu.memory_space<vmem>>, %arg3: memref<1x256xf32, #tpu.memory_space<vmem>>, %arg4: memref<2x64xf32, #tpu.memory_space<vmem>>) attributes {dimension_semantics = [#tpu.dimension_semantics<arbitrary>], iteration_bounds = array<i64: 1>, scalar_prefetch = 0 : i64, scratch_operands = 0 : i64, tpu.core_type = #tpu.core_type<tc>, window_params = [{pipeline_mode = #tpu.pipeline_mode<synchronous>, transform_indices = @transform_0, window_bounds = array<i64: 8, 2, 16>}, {pipeline_mode = #tpu.pipeline_mode<synchronous>, transform_indices = @transform_1, window_bounds = array<i64: 80, 256>}, {pipeline_mode = #tpu.pipeline_mode<synchronous>, transform_indices = @transform_2, window_bounds = array<i64: 1, 256>}, {pipeline_mode = #tpu.pipeline_mode<synchronous>, transform_indices = @transform_3, window_bounds = array<i64: 2, 64>}]} {
    %c0 = arith.constant 0 : index
    %c0_0 = arith.constant 0 : index
    %0 = vector.load %arg2[%c0, %c0_0] : memref<80x256xf32, #tpu.memory_space<vmem>>, vector<80x256xf32>
    %c0_1 = arith.constant 0 : index
    %c0_2 = arith.constant 0 : index
    %1 = vector.load %arg3[%c0_1, %c0_2] : memref<1x256xf32, #tpu.memory_space<vmem>>, vector<1x256xf32>
    %cst = arith.constant 0.000000e+00 : f32
    %2 = vector.broadcast %cst : f32 to vector<2x64xf32>
    %cst_3 = arith.constant 0.000000e+00 : f32
    %3 = vector.broadcast %cst_3 : f32 to vector<2x64xf32>
    %c0_i32 = arith.constant 0 : i32
    %4 = arith.index_cast %c0_i32 : i32 to index
    %c0_4 = arith.constant 0 : index
    %c0_5 = arith.constant 0 : index
    %5 = vector.load %arg1[%4, %c0_4, %c0_5] : memref<8x2x16xf32, #tpu.memory_space<vmem>>, vector<1x2x16xf32>
    %6 = vector.shape_cast %5 : vector<1x2x16xf32> to vector<2x16xf32>
    %7 = tpu.concatenate %6, %2 in 1 : vector<2x16xf32>, vector<2x64xf32> -> vector<2x80xf32>
    %cst_6 = arith.constant dense<0.000000e+00> : vector<2x256xf32>
    %8 = tpu.matmul %7, %0, %cst_6 {dimension_numbers = #tpu.dot_dimension_numbers<[1], [0], [0], [1], [0, 0, 1, 1], [], []>} : vector<2x80xf32>, vector<80x256xf32>, vector<2x256xf32> -> vector<2x256xf32>
    %9 = vector.broadcast %1 : vector<1x256xf32> to vector<2x256xf32>
    %10 = arith.addf %8, %9 : vector<2x256xf32>
    %11 = vector.extract_strided_slice %10 {offsets = [0, 0], sizes = [2, 192], strides = [1, 1]} : vector<2x256xf32> to vector<2x192xf32>
    %12 = arith.negf %11 : vector<2x192xf32>
    %13 = math.exp %12 : vector<2x192xf32>
    %cst_7 = arith.constant 1.000000e+00 : f32
    %14 = vector.broadcast %cst_7 : f32 to vector<2x192xf32>
    %15 = arith.addf %14, %13 : vector<2x192xf32>
    %16 = arith.divf %14, %15 : vector<2x192xf32>
    %17 = vector.extract_strided_slice %16 {offsets = [0, 0], sizes = [2, 64], strides = [1, 1]} : vector<2x192xf32> to vector<2x64xf32>
    %18 = vector.extract_strided_slice %16 {offsets = [0, 64], sizes = [2, 64], strides = [1, 1]} : vector<2x192xf32> to vector<2x64xf32>
    %19 = vector.extract_strided_slice %16 {offsets = [0, 128], sizes = [2, 64], strides = [1, 1]} : vector<2x192xf32> to vector<2x64xf32>
    %20 = vector.extract_strided_slice %10 {offsets = [0, 192], sizes = [2, 64], strides = [1, 1]} : vector<2x256xf32> to vector<2x64xf32>
    %21 = math.tanh %20 : vector<2x64xf32>
    %22 = arith.mulf %18, %3 : vector<2x64xf32>
    %23 = arith.mulf %17, %21 : vector<2x64xf32>
    %24 = arith.addf %22, %23 : vector<2x64xf32>
    %25 = math.tanh %24 : vector<2x64xf32>
    %26 = arith.mulf %19, %25 : vector<2x64xf32>
    %c1_i32 = arith.constant 1 : i32
    %27 = arith.index_cast %c1_i32 : i32 to index
    %c0_8 = arith.constant 0 : index
    %c0_9 = arith.constant 0 : index
    %28 = vector.load %arg1[%27, %c0_8, %c0_9] : memref<8x2x16xf32, #tpu.memory_space<vmem>>, vector<1x2x16xf32>
    %29 = vector.shape_cast %28 : vector<1x2x16xf32> to vector<2x16xf32>
    %30 = tpu.concatenate %29, %26 in 1 : vector<2x16xf32>, vector<2x64xf32> -> vector<2x80xf32>
    %cst_10 = arith.constant dense<0.000000e+00> : vector<2x256xf32>
    %31 = tpu.matmul %30, %0, %cst_10 {dimension_numbers = #tpu.dot_dimension_numbers<[1], [0], [0], [1], [0, 0, 1, 1], [], []>} : vector<2x80xf32>, vector<80x256xf32>, vector<2x256xf32> -> vector<2x256xf32>
    %32 = vector.broadcast %1 : vector<1x256xf32> to vector<2x256xf32>
    %33 = arith.addf %31, %32 : vector<2x256xf32>
    %34 = vector.extract_strided_slice %33 {offsets = [0, 0], sizes = [2, 192], strides = [1, 1]} : vector<2x256xf32> to vector<2x192xf32>
    %35 = arith.negf %34 : vector<2x192xf32>
    %36 = math.exp %35 : vector<2x192xf32>
    %cst_11 = arith.constant 1.000000e+00 : f32
    %37 = vector.broadcast %cst_11 : f32 to vector<2x192xf32>
    %38 = arith.addf %37, %36 : vector<2x192xf32>
    %39 = arith.divf %37, %38 : vector<2x192xf32>
    %40 = vector.extract_strided_slice %39 {offsets = [0, 0], sizes = [2, 64], strides = [1, 1]} : vector<2x192xf32> to vector<2x64xf32>
    %41 = vector.extract_strided_slice %39 {offsets = [0, 64], sizes = [2, 64], strides = [1, 1]} : vector<2x192xf32> to vector<2x64xf32>
    %42 = vector.extract_strided_slice %39 {offsets = [0, 128], sizes = [2, 64], strides = [1, 1]} : vector<2x192xf32> to vector<2x64xf32>
    %43 = vector.extract_strided_slice %33 {offsets = [0, 192], sizes = [2, 64], strides = [1, 1]} : vector<2x256xf32> to vector<2x64xf32>
    %44 = math.tanh %43 : vector<2x64xf32>
    %45 = arith.mulf %41, %24 : vector<2x64xf32>
    %46 = arith.mulf %40, %44 : vector<2x64xf32>
    %47 = arith.addf %45, %46 : vector<2x64xf32>
    %48 = math.tanh %47 : vector<2x64xf32>
    %49 = arith.mulf %42, %48 : vector<2x64xf32>
    %c2_i32 = arith.constant 2 : i32
    %50 = arith.index_cast %c2_i32 : i32 to index
    %c0_12 = arith.constant 0 : index
    %c0_13 = arith.constant 0 : index
    %51 = vector.load %arg1[%50, %c0_12, %c0_13] : memref<8x2x16xf32, #tpu.memory_space<vmem>>, vector<1x2x16xf32>
    %52 = vector.shape_cast %51 : vector<1x2x16xf32> to vector<2x16xf32>
    %53 = tpu.concatenate %52, %49 in 1 : vector<2x16xf32>, vector<2x64xf32> -> vector<2x80xf32>
    %cst_14 = arith.constant dense<0.000000e+00> : vector<2x256xf32>
    %54 = tpu.matmul %53, %0, %cst_14 {dimension_numbers = #tpu.dot_dimension_numbers<[1], [0], [0], [1], [0, 0, 1, 1], [], []>} : vector<2x80xf32>, vector<80x256xf32>, vector<2x256xf32> -> vector<2x256xf32>
    %55 = vector.broadcast %1 : vector<1x256xf32> to vector<2x256xf32>
    %56 = arith.addf %54, %55 : vector<2x256xf32>
    %57 = vector.extract_strided_slice %56 {offsets = [0, 0], sizes = [2, 192], strides = [1, 1]} : vector<2x256xf32> to vector<2x192xf32>
    %58 = arith.negf %57 : vector<2x192xf32>
    %59 = math.exp %58 : vector<2x192xf32>
    %cst_15 = arith.constant 1.000000e+00 : f32
    %60 = vector.broadcast %cst_15 : f32 to vector<2x192xf32>
    %61 = arith.addf %60, %59 : vector<2x192xf32>
    %62 = arith.divf %60, %61 : vector<2x192xf32>
    %63 = vector.extract_strided_slice %62 {offsets = [0, 0], sizes = [2, 64], strides = [1, 1]} : vector<2x192xf32> to vector<2x64xf32>
    %64 = vector.extract_strided_slice %62 {offsets = [0, 64], sizes = [2, 64], strides = [1, 1]} : vector<2x192xf32> to vector<2x64xf32>
    %65 = vector.extract_strided_slice %62 {offsets = [0, 128], sizes = [2, 64], strides = [1, 1]} : vector<2x192xf32> to vector<2x64xf32>
    %66 = vector.extract_strided_slice %56 {offsets = [0, 192], sizes = [2, 64], strides = [1, 1]} : vector<2x256xf32> to vector<2x64xf32>
    %67 = math.tanh %66 : vector<2x64xf32>
    %68 = arith.mulf %64, %47 : vector<2x64xf32>
    %69 = arith.mulf %63, %67 : vector<2x64xf32>
    %70 = arith.addf %68, %69 : vector<2x64xf32>
    %71 = math.tanh %70 : vector<2x64xf32>
    %72 = arith.mulf %65, %71 : vector<2x64xf32>
    %c3_i32 = arith.constant 3 : i32
    %73 = arith.index_cast %c3_i32 : i32 to index
    %c0_16 = arith.constant 0 : index
    %c0_17 = arith.constant 0 : index
    %74 = vector.load %arg1[%73, %c0_16, %c0_17] : memref<8x2x16xf32, #tpu.memory_space<vmem>>, vector<1x2x16xf32>
    %75 = vector.shape_cast %74 : vector<1x2x16xf32> to vector<2x16xf32>
    %76 = tpu.concatenate %75, %72 in 1 : vector<2x16xf32>, vector<2x64xf32> -> vector<2x80xf32>
    %cst_18 = arith.constant dense<0.000000e+00> : vector<2x256xf32>
    %77 = tpu.matmul %76, %0, %cst_18 {dimension_numbers = #tpu.dot_dimension_numbers<[1], [0], [0], [1], [0, 0, 1, 1], [], []>} : vector<2x80xf32>, vector<80x256xf32>, vector<2x256xf32> -> vector<2x256xf32>
    %78 = vector.broadcast %1 : vector<1x256xf32> to vector<2x256xf32>
    %79 = arith.addf %77, %78 : vector<2x256xf32>
    %80 = vector.extract_strided_slice %79 {offsets = [0, 0], sizes = [2, 192], strides = [1, 1]} : vector<2x256xf32> to vector<2x192xf32>
    %81 = arith.negf %80 : vector<2x192xf32>
    %82 = math.exp %81 : vector<2x192xf32>
    %cst_19 = arith.constant 1.000000e+00 : f32
    %83 = vector.broadcast %cst_19 : f32 to vector<2x192xf32>
    %84 = arith.addf %83, %82 : vector<2x192xf32>
    %85 = arith.divf %83, %84 : vector<2x192xf32>
    %86 = vector.extract_strided_slice %85 {offsets = [0, 0], sizes = [2, 64], strides = [1, 1]} : vector<2x192xf32> to vector<2x64xf32>
    %87 = vector.extract_strided_slice %85 {offsets = [0, 64], sizes = [2, 64], strides = [1, 1]} : vector<2x192xf32> to vector<2x64xf32>
    %88 = vector.extract_strided_slice %85 {offsets = [0, 128], sizes = [2, 64], strides = [1, 1]} : vector<2x192xf32> to vector<2x64xf32>
    %89 = vector.extract_strided_slice %79 {offsets = [0, 192], sizes = [2, 64], strides = [1, 1]} : vector<2x256xf32> to vector<2x64xf32>
    %90 = math.tanh %89 : vector<2x64xf32>
    %91 = arith.mulf %87, %70 : vector<2x64xf32>
    %92 = arith.mulf %86, %90 : vector<2x64xf32>
    %93 = arith.addf %91, %92 : vector<2x64xf32>
    %94 = math.tanh %93 : vector<2x64xf32>
    %95 = arith.mulf %88, %94 : vector<2x64xf32>
    %c4_i32 = arith.constant 4 : i32
    %96 = arith.index_cast %c4_i32 : i32 to index
    %c0_20 = arith.constant 0 : index
    %c0_21 = arith.constant 0 : index
    %97 = vector.load %arg1[%96, %c0_20, %c0_21] : memref<8x2x16xf32, #tpu.memory_space<vmem>>, vector<1x2x16xf32>
    %98 = vector.shape_cast %97 : vector<1x2x16xf32> to vector<2x16xf32>
    %99 = tpu.concatenate %98, %95 in 1 : vector<2x16xf32>, vector<2x64xf32> -> vector<2x80xf32>
    %cst_22 = arith.constant dense<0.000000e+00> : vector<2x256xf32>
    %100 = tpu.matmul %99, %0, %cst_22 {dimension_numbers = #tpu.dot_dimension_numbers<[1], [0], [0], [1], [0, 0, 1, 1], [], []>} : vector<2x80xf32>, vector<80x256xf32>, vector<2x256xf32> -> vector<2x256xf32>
    %101 = vector.broadcast %1 : vector<1x256xf32> to vector<2x256xf32>
    %102 = arith.addf %100, %101 : vector<2x256xf32>
    %103 = vector.extract_strided_slice %102 {offsets = [0, 0], sizes = [2, 192], strides = [1, 1]} : vector<2x256xf32> to vector<2x192xf32>
    %104 = arith.negf %103 : vector<2x192xf32>
    %105 = math.exp %104 : vector<2x192xf32>
    %cst_23 = arith.constant 1.000000e+00 : f32
    %106 = vector.broadcast %cst_23 : f32 to vector<2x192xf32>
    %107 = arith.addf %106, %105 : vector<2x192xf32>
    %108 = arith.divf %106, %107 : vector<2x192xf32>
    %109 = vector.extract_strided_slice %108 {offsets = [0, 0], sizes = [2, 64], strides = [1, 1]} : vector<2x192xf32> to vector<2x64xf32>
    %110 = vector.extract_strided_slice %108 {offsets = [0, 64], sizes = [2, 64], strides = [1, 1]} : vector<2x192xf32> to vector<2x64xf32>
    %111 = vector.extract_strided_slice %108 {offsets = [0, 128], sizes = [2, 64], strides = [1, 1]} : vector<2x192xf32> to vector<2x64xf32>
    %112 = vector.extract_strided_slice %102 {offsets = [0, 192], sizes = [2, 64], strides = [1, 1]} : vector<2x256xf32> to vector<2x64xf32>
    %113 = math.tanh %112 : vector<2x64xf32>
    %114 = arith.mulf %110, %93 : vector<2x64xf32>
    %115 = arith.mulf %109, %113 : vector<2x64xf32>
    %116 = arith.addf %114, %115 : vector<2x64xf32>
    %117 = math.tanh %116 : vector<2x64xf32>
    %118 = arith.mulf %111, %117 : vector<2x64xf32>
    %c5_i32 = arith.constant 5 : i32
    %119 = arith.index_cast %c5_i32 : i32 to index
    %c0_24 = arith.constant 0 : index
    %c0_25 = arith.constant 0 : index
    %120 = vector.load %arg1[%119, %c0_24, %c0_25] : memref<8x2x16xf32, #tpu.memory_space<vmem>>, vector<1x2x16xf32>
    %121 = vector.shape_cast %120 : vector<1x2x16xf32> to vector<2x16xf32>
    %122 = tpu.concatenate %121, %118 in 1 : vector<2x16xf32>, vector<2x64xf32> -> vector<2x80xf32>
    %cst_26 = arith.constant dense<0.000000e+00> : vector<2x256xf32>
    %123 = tpu.matmul %122, %0, %cst_26 {dimension_numbers = #tpu.dot_dimension_numbers<[1], [0], [0], [1], [0, 0, 1, 1], [], []>} : vector<2x80xf32>, vector<80x256xf32>, vector<2x256xf32> -> vector<2x256xf32>
    %124 = vector.broadcast %1 : vector<1x256xf32> to vector<2x256xf32>
    %125 = arith.addf %123, %124 : vector<2x256xf32>
    %126 = vector.extract_strided_slice %125 {offsets = [0, 0], sizes = [2, 192], strides = [1, 1]} : vector<2x256xf32> to vector<2x192xf32>
    %127 = arith.negf %126 : vector<2x192xf32>
    %128 = math.exp %127 : vector<2x192xf32>
    %cst_27 = arith.constant 1.000000e+00 : f32
    %129 = vector.broadcast %cst_27 : f32 to vector<2x192xf32>
    %130 = arith.addf %129, %128 : vector<2x192xf32>
    %131 = arith.divf %129, %130 : vector<2x192xf32>
    %132 = vector.extract_strided_slice %131 {offsets = [0, 0], sizes = [2, 64], strides = [1, 1]} : vector<2x192xf32> to vector<2x64xf32>
    %133 = vector.extract_strided_slice %131 {offsets = [0, 64], sizes = [2, 64], strides = [1, 1]} : vector<2x192xf32> to vector<2x64xf32>
    %134 = vector.extract_strided_slice %131 {offsets = [0, 128], sizes = [2, 64], strides = [1, 1]} : vector<2x192xf32> to vector<2x64xf32>
    %135 = vector.extract_strided_slice %125 {offsets = [0, 192], sizes = [2, 64], strides = [1, 1]} : vector<2x256xf32> to vector<2x64xf32>
    %136 = math.tanh %135 : vector<2x64xf32>
    %137 = arith.mulf %133, %116 : vector<2x64xf32>
    %138 = arith.mulf %132, %136 : vector<2x64xf32>
    %139 = arith.addf %137, %138 : vector<2x64xf32>
    %140 = math.tanh %139 : vector<2x64xf32>
    %141 = arith.mulf %134, %140 : vector<2x64xf32>
    %c6_i32 = arith.constant 6 : i32
    %142 = arith.index_cast %c6_i32 : i32 to index
    %c0_28 = arith.constant 0 : index
    %c0_29 = arith.constant 0 : index
    %143 = vector.load %arg1[%142, %c0_28, %c0_29] : memref<8x2x16xf32, #tpu.memory_space<vmem>>, vector<1x2x16xf32>
    %144 = vector.shape_cast %143 : vector<1x2x16xf32> to vector<2x16xf32>
    %145 = tpu.concatenate %144, %141 in 1 : vector<2x16xf32>, vector<2x64xf32> -> vector<2x80xf32>
    %cst_30 = arith.constant dense<0.000000e+00> : vector<2x256xf32>
    %146 = tpu.matmul %145, %0, %cst_30 {dimension_numbers = #tpu.dot_dimension_numbers<[1], [0], [0], [1], [0, 0, 1, 1], [], []>} : vector<2x80xf32>, vector<80x256xf32>, vector<2x256xf32> -> vector<2x256xf32>
    %147 = vector.broadcast %1 : vector<1x256xf32> to vector<2x256xf32>
    %148 = arith.addf %146, %147 : vector<2x256xf32>
    %149 = vector.extract_strided_slice %148 {offsets = [0, 0], sizes = [2, 192], strides = [1, 1]} : vector<2x256xf32> to vector<2x192xf32>
    %150 = arith.negf %149 : vector<2x192xf32>
    %151 = math.exp %150 : vector<2x192xf32>
    %cst_31 = arith.constant 1.000000e+00 : f32
    %152 = vector.broadcast %cst_31 : f32 to vector<2x192xf32>
    %153 = arith.addf %152, %151 : vector<2x192xf32>
    %154 = arith.divf %152, %153 : vector<2x192xf32>
    %155 = vector.extract_strided_slice %154 {offsets = [0, 0], sizes = [2, 64], strides = [1, 1]} : vector<2x192xf32> to vector<2x64xf32>
    %156 = vector.extract_strided_slice %154 {offsets = [0, 64], sizes = [2, 64], strides = [1, 1]} : vector<2x192xf32> to vector<2x64xf32>
    %157 = vector.extract_strided_slice %154 {offsets = [0, 128], sizes = [2, 64], strides = [1, 1]} : vector<2x192xf32> to vector<2x64xf32>
    %158 = vector.extract_strided_slice %148 {offsets = [0, 192], sizes = [2, 64], strides = [1, 1]} : vector<2x256xf32> to vector<2x64xf32>
    %159 = math.tanh %158 : vector<2x64xf32>
    %160 = arith.mulf %156, %139 : vector<2x64xf32>
    %161 = arith.mulf %155, %159 : vector<2x64xf32>
    %162 = arith.addf %160, %161 : vector<2x64xf32>
    %163 = math.tanh %162 : vector<2x64xf32>
    %164 = arith.mulf %157, %163 : vector<2x64xf32>
    %c7_i32 = arith.constant 7 : i32
    %165 = arith.index_cast %c7_i32 : i32 to index
    %c0_32 = arith.constant 0 : index
    %c0_33 = arith.constant 0 : index
    %166 = vector.load %arg1[%165, %c0_32, %c0_33] : memref<8x2x16xf32, #tpu.memory_space<vmem>>, vector<1x2x16xf32>
    %167 = vector.shape_cast %166 : vector<1x2x16xf32> to vector<2x16xf32>
    %168 = tpu.concatenate %167, %164 in 1 : vector<2x16xf32>, vector<2x64xf32> -> vector<2x80xf32>
    %cst_34 = arith.constant dense<0.000000e+00> : vector<2x256xf32>
    %169 = tpu.matmul %168, %0, %cst_34 {dimension_numbers = #tpu.dot_dimension_numbers<[1], [0], [0], [1], [0, 0, 1, 1], [], []>} : vector<2x80xf32>, vector<80x256xf32>, vector<2x256xf32> -> vector<2x256xf32>
    %170 = vector.broadcast %1 : vector<1x256xf32> to vector<2x256xf32>
    %171 = arith.addf %169, %170 : vector<2x256xf32>
    %172 = vector.extract_strided_slice %171 {offsets = [0, 0], sizes = [2, 192], strides = [1, 1]} : vector<2x256xf32> to vector<2x192xf32>
    %173 = arith.negf %172 : vector<2x192xf32>
    %174 = math.exp %173 : vector<2x192xf32>
    %cst_35 = arith.constant 1.000000e+00 : f32
    %175 = vector.broadcast %cst_35 : f32 to vector<2x192xf32>
    %176 = arith.addf %175, %174 : vector<2x192xf32>
    %177 = arith.divf %175, %176 : vector<2x192xf32>
    %178 = vector.extract_strided_slice %177 {offsets = [0, 0], sizes = [2, 64], strides = [1, 1]} : vector<2x192xf32> to vector<2x64xf32>
    %179 = vector.extract_strided_slice %177 {offsets = [0, 64], sizes = [2, 64], strides = [1, 1]} : vector<2x192xf32> to vector<2x64xf32>
    %180 = vector.extract_strided_slice %177 {offsets = [0, 128], sizes = [2, 64], strides = [1, 1]} : vector<2x192xf32> to vector<2x64xf32>
    %181 = vector.extract_strided_slice %171 {offsets = [0, 192], sizes = [2, 64], strides = [1, 1]} : vector<2x256xf32> to vector<2x64xf32>
    %182 = math.tanh %181 : vector<2x64xf32>
    %183 = arith.mulf %179, %162 : vector<2x64xf32>
    %184 = arith.mulf %178, %182 : vector<2x64xf32>
    %185 = arith.addf %183, %184 : vector<2x64xf32>
    %186 = math.tanh %185 : vector<2x64xf32>
    %187 = arith.mulf %180, %186 : vector<2x64xf32>
    %c8_i32 = arith.constant 8 : i32
    %c0_36 = arith.constant 0 : index
    %c0_37 = arith.constant 0 : index
    %188 = vector.load %arg4[%c0_36, %c0_37] : memref<2x64xf32, #tpu.memory_space<vmem>>, vector<2x64xf32>
    tpu.vector_store %arg4[%c0_36, %c0_37], %187 {strides = array<i32>} : memref<2x64xf32, #tpu.memory_space<vmem>>, vector<2x64xf32>,
    return
  }
  func.func @transform_0(%arg0: i32) -> (i32, i32, i32) {
    %c0_i32 = arith.constant 0 : i32
    %c0_i32_0 = arith.constant 0 : i32
    %c0_i32_1 = arith.constant 0 : i32
    %c0_i32_2 = arith.constant 0 : i32
    return %c0_i32, %c0_i32_0, %c0_i32_1 : i32, i32, i32
  }
  func.func @transform_1(%arg0: i32) -> (i32, i32) {
    %c0_i32 = arith.constant 0 : i32
    %c0_i32_0 = arith.constant 0 : i32
    %c0_i32_1 = arith.constant 0 : i32
    return %c0_i32, %c0_i32_0 : i32, i32
  }
  func.func @transform_2(%arg0: i32) -> (i32, i32) {
    %c0_i32 = arith.constant 0 : i32
    %c0_i32_0 = arith.constant 0 : i32
    %c0_i32_1 = arith.constant 0 : i32
    return %c0_i32, %c0_i32_0 : i32, i32
  }
  func.func @transform_3(%arg0: i32) -> (i32, i32) {
    %c0_i32 = arith.constant 0 : i32
    %c0_i32_0 = arith.constant 0 : i32
    %c0_i32_1 = arith.constant 0 : i32
    return %c0_i32, %c0_i32_0 : i32, i32
  }
}

</mosaic_0001>

<llo_original>
// kernel: lstm_forward.1
$region0: #{lstm_forward.1}
  #allocation0 [shape = 'u32[]', space=smem, size = 0x4, offset = 0x4, fixed_abs, tag = 'smem constant byte address 0x4 - core index']
  #allocation1 [shape = 'u32[144,128]{1,0:T(1,128)}', space=vmem, size = 0x12000, scoped, tag = 'internal scratch']
  %s0 = inlined_call_operand.vmem [shape: f32[8,2,16], index: 0, kind: input, shape index: {}]
  %s1 = inlined_call_operand.vmem [shape: f32[80,256], index: 1, kind: input, shape index: {}]
  %s2 = inlined_call_operand.vmem [shape: f32[1,256], index: 2, kind: input, shape index: {}]
  %s3 = inlined_call_operand.vmem [shape: f32[2,64], index: 3, kind: output, shape index: {}]
  %s4 = sld [smem:[#allocation0]]
  $region22: #{lstm_forward.1} parent=0
    _
  %s6 = ssub.s32 1, %s4
  %s7 = scalar_select 0, %s6, %s4
  // Predicated region
  $region2: #{lstm_forward.1} parent=0 // pred_check
    _
  $region3: #{lstm_forward.1} parent=0 // pred_check_branch
    %9 = sbr.rel (0) target = $region5
  $region4: #{lstm_forward.1} parent=0 // pred_region
    _
  $region5: #{lstm_forward.1} parent=0 // pred_fallthru
    _
  // Predicated region
  $region6: #{lstm_forward.1} parent=0 // pred_check
    _
  $region7: #{lstm_forward.1} parent=0 // pred_check_branch
    %11 = sbr.rel (0) target = $region9
  $region8: #{lstm_forward.1} parent=0 // pred_region
    _
  $region9: #{lstm_forward.1} parent=0 // pred_fallthru
    _
  // Predicated region
  $region10: #{lstm_forward.1} parent=0 // pred_check
    _
  $region11: #{lstm_forward.1} parent=0 // pred_check_branch
    %13 = sbr.rel (0) target = $region13
  $region12: #{lstm_forward.1} parent=0 // pred_region
    _
  $region13: #{lstm_forward.1} parent=0 // pred_fallthru
    _
  %v14 = vld [vmem:[%s1] sm:$0xff]
  %v15 = vld [vmem:[%s1 + $0x8] sm:$0xff]
  %v16 = vld [vmem:[%s1 + $0x10] sm:$0xff]
  %v17 = vld [vmem:[%s1 + $0x18] sm:$0xff]
  %v18 = vld [vmem:[%s1 + $0x20] sm:$0xff]
  %v19 = vld [vmem:[%s1 + $0x28] sm:$0xff]
  %v20 = vld [vmem:[%s1 + $0x30] sm:$0xff]
  %v21 = vld [vmem:[%s1 + $0x38] sm:$0xff]
  %v22 = vld [vmem:[%s1 + $0x40] sm:$0xff]
  %v23 = vld [vmem:[%s1 + $0x48] sm:$0xff]
  %v24 = vld [vmem:[%s1 + $0x50] sm:$0xff]
  %v25 = vld [vmem:[%s1 + $0x58] sm:$0xff]
  %v26 = vld [vmem:[%s1 + $0x60] sm:$0xff]
  %v27 = vld [vmem:[%s1 + $0x68] sm:$0xff]
  %v28 = vld [vmem:[%s1 + $0x70] sm:$0xff]
  %v29 = vld [vmem:[%s1 + $0x78] sm:$0xff]
  %v30 = vld [vmem:[%s1 + $0x80] sm:$0xff]
  %v31 = vld [vmem:[%s1 + $0x88] sm:$0xff]
  %v32 = vld [vmem:[%s1 + $0x90] sm:$0xff]
  %v33 = vld [vmem:[%s1 + $0x98] sm:$0xff]
  %v34 = vld [vmem:[%s2] sm:$0x3]
  %v35 = vld [vmem:[%s0] sm:$0x3]
  %vm36 = vcmask 130048
  %v37 = vsel %vm36, %v35, 0.0
  %v39 = vlaneseq
  %v40 = vshrl.u32 %v39, 7
  %v41 = vsub.s32 0, %v40
  %v42 = vrot.slane %v34, %v41
  %v43 = vlaneseq
  %v44 = vshrl.u32 %v43, 7
  %v45 = vsub.s32 1, %v44
  %v46 = vrot.slane %v34, %v45
  %vm49 = vcmask 654336
  %v51 = vsel %vm49, %v37, 0
  %53 = vmatprep.subr.mxu0 0.0
  %54 = vmatpush1.msra.mxu0 0.0
  %55 = vmatprep.subr.mxu0 0.0
  %56 = vmatpush1.msra.mxu0 0.0
  %57 = vmatprep.subr.mxu0 0.0
  %58 = vmatpush1.msra.mxu0 0.0
  %59 = vmatprep.subr.mxu0 0.0
  %60 = vmatpush1.msra.mxu0 0.0
  %61 = vmatprep.subr.mxu0 0.0
  %62 = vmatpush1.msra.mxu0 0.0
  %63 = vmatprep.subr.mxu0 0.0
  %64 = vmatpush1.msra.mxu0 0.0
  %65 = vmatprep.subr.mxu0 %v33
  %66 = vmatpush1.msra.mxu0 %v32
  %67 = vmatprep.subr.mxu0 %v31
  %68 = vmatpush1.msra.mxu0 %v30
  %69 = vmatprep.subr.mxu0 %v29
  %70 = vmatpush1.msra.mxu0 %v28
  %71 = vmatprep.subr.mxu0 %v27
  %72 = vmatpush1.msra.mxu0 %v26
  %73 = vmatprep.subr.mxu0 %v25
  %74 = vmatpush1.msra.mxu0 %v24
  %75 = vmatprep.subr.mxu0 %v23
  %76 = vmatpush1.msra.mxu0 %v22
  %77 = vmatprep.subr.mxu0 %v21
  %78 = vmatpush1.msra.mxu0 %v20
  %79 = vmatprep.subr.mxu0 %v19
  %80 = vmatpush1.msra.mxu0 %v18
  %81 = vmatprep.subr.mxu0 %v17
  %82 = vmatpush1.msra.mxu0 %v16
  %83 = vmatprep.subr.mxu0 %v15
  %84 = vmatpush1.msra.mxu0 %v14
  %85 = vmatprep.subr.mxu0 0.0
  %86 = vmatpush2.msra.mxu0 0.0
  %87 = vmatprep.subr.mxu0 0.0
  %88 = vmatpush2.msra.mxu0 0.0
  %89 = vmatprep.subr.mxu0 0.0
  %90 = vmatpush2.msra.mxu0 0.0
  %91 = vmatprep.subr.mxu0 0.0
  %92 = vmatpush2.msra.mxu0 0.0
  %93 = vmatprep.subr.mxu0 0.0
  %94 = vmatpush2.msra.mxu0 0.0
  %95 = vmatprep.subr.mxu0 0.0
  %96 = vmatpush2.msra.mxu0 0.0
  %97 = vmatprep.subr.mxu0 0.0
  %98 = vmatpush2.msra.mxu0 0.0
  %99 = vmatprep.subr.mxu0 0.0
  %100 = vmatpush2.msra.mxu0 0.0
  %101 = vmatprep.subr.mxu0 0.0
  %102 = vmatpush2.msra.mxu0 0.0
  %103 = vmatprep.subr.mxu0 0.0
  %104 = vmatpush2.msra.mxu0 0.0
  %105 = vmatprep.subr.mxu0 0.0
  %106 = vmatpush2.msra.mxu0 0.0
  %107 = vmatprep.subr.mxu0 0.0
  %108 = vmatpush2.msra.mxu0 0.0
  %109 = vmatprep.subr.mxu0 0.0
  %110 = vmatpush2.msra.mxu0 0.0
  %111 = vmatprep.subr.mxu0 0.0
  %112 = vmatpush2.msra.mxu0 0.0
  %113 = vmatprep.subr.mxu0 0.0
  %114 = vmatpush2.msra.mxu0 0.0
  %115 = vmatprep.subr.mxu0 0.0
  %116 = vmatpush2.msra.mxu0 0.0
  %117 = vmatprep.mubr.f32.mxu0 0.0
  %118 = vmatmul.mubr.f32.gmra.mxu0 %v51
  %v119 = vpop.f32.mrf.mxu0
  %v120 = vadd.f32 %v42, %v119
  %v121 = vpop.f32.mrf.mxu0
  %v122 = vadd.f32 %v46, %v121
  %123 = vdwg.mxu0
  %v124 = vxor.u32 %v120, 2147483648
  %v125 = vxor.u32 %v122, 2147483648
  %v126 = vmul.f32 %v124, 1.442695
  %v127 = vpow.pop %v126
  %v128 = vmul.f32 %v125, 1.442695
  %v129 = vpow.pop %v128
  %v130 = vadd.f32 %v127, 1.0
  %v131 = vadd.f32 %v129, 1.0
  %v132 = vrcp.pop %v130
  %v133 = vmul.f32 1.0, %v132
  %v134 = vrcp.pop %v131
  %v135 = vmul.f32 1.0, %v134
  %v136 = vtanh.pop %v122
  %v137 = vmul.f32 %v133, 0.0
  %139 = vrot.lane.b32.xlu0 %v136, 64
  %v140 = vpop.permute.xlu0 %139
  %v142 = vmul.f32 %v133, %v140
  %144 = vrot.lane.b32.xlu0 %v142, 64
  %v145 = vpop.permute.xlu0 %144
  %v147 = vadd.f32 %v137, %v145
  %v148 = vtanh.pop %v147
  %150 = vrot.lane.b32.xlu0 %v148, 64
  %v151 = vpop.permute.xlu0 %150
  %v153 = vmul.f32 %v135, %v151
  %s154 = scalar_lea.vmem %s0, 2
  %v155 = vld [vmem:[%s154] sm:$0x3]
  %157 = vrot.lane.b32.xlu0 %v153, 16
  %v158 = vpop.permute.xlu0 %157
  %v160 = vsel %vm36, %v155, %v158
  %v162 = vsel %vm49, %v160, 0
  %164 = vmatprep.subr.mxu0 0.0
  %165 = vmatpush1.msra.mxu0 0.0
  %166 = vmatprep.subr.mxu0 0.0
  %167 = vmatpush1.msra.mxu0 0.0
  %168 = vmatprep.subr.mxu0 0.0
  %169 = vmatpush1.msra.mxu0 0.0
  %170 = vmatprep.subr.mxu0 0.0
  %171 = vmatpush1.msra.mxu0 0.0
  %172 = vmatprep.subr.mxu0 0.0
  %173 = vmatpush1.msra.mxu0 0.0
  %174 = vmatprep.subr.mxu0 0.0
  %175 = vmatpush1.msra.mxu0 0.0
  %176 = vmatprep.subr.mxu0 %v33
  %177 = vmatpush1.msra.mxu0 %v32
  %178 = vmatprep.subr.mxu0 %v31
  %179 = vmatpush1.msra.mxu0 %v30
  %180 = vmatprep.subr.mxu0 %v29
  %181 = vmatpush1.msra.mxu0 %v28
  %182 = vmatprep.subr.mxu0 %v27
  %183 = vmatpush1.msra.mxu0 %v26
  %184 = vmatprep.subr.mxu0 %v25
  %185 = vmatpush1.msra.mxu0 %v24
  %186 = vmatprep.subr.mxu0 %v23
  %187 = vmatpush1.msra.mxu0 %v22
  %188 = vmatprep.subr.mxu0 %v21
  %189 = vmatpush1.msra.mxu0 %v20
  %190 = vmatprep.subr.mxu0 %v19
  %191 = vmatpush1.msra.mxu0 %v18
  %192 = vmatprep.subr.mxu0 %v17
  %193 = vmatpush1.msra.mxu0 %v16
  %194 = vmatprep.subr.mxu0 %v15
  %195 = vmatpush1.msra.mxu0 %v14
  %196 = vmatprep.subr.mxu0 0.0
  %197 = vmatpush2.msra.mxu0 0.0
  %198 = vmatprep.subr.mxu0 0.0
  %199 = vmatpush2.msra.mxu0 0.0
  %200 = vmatprep.subr.mxu0 0.0
  %201 = vmatpush2.msra.mxu0 0.0
  %202 = vmatprep.subr.mxu0 0.0
  %203 = vmatpush2.msra.mxu0 0.0
  %204 = vmatprep.subr.mxu0 0.0
  %205 = vmatpush2.msra.mxu0 0.0
  %206 = vmatprep.subr.mxu0 0.0
  %207 = vmatpush2.msra.mxu0 0.0
  %208 = vmatprep.subr.mxu0 0.0
  %209 = vmatpush2.msra.mxu0 0.0
  %210 = vmatprep.subr.mxu0 0.0
  %211 = vmatpush2.msra.mxu0 0.0
  %212 = vmatprep.subr.mxu0 0.0
  %213 = vmatpush2.msra.mxu0 0.0
  %214 = vmatprep.subr.mxu0 0.0
  %215 = vmatpush2.msra.mxu0 0.0
  %216 = vmatprep.subr.mxu0 0.0
  %217 = vmatpush2.msra.mxu0 0.0
  %218 = vmatprep.subr.mxu0 0.0
  %219 = vmatpush2.msra.mxu0 0.0
  %220 = vmatprep.subr.mxu0 0.0
  %221 = vmatpush2.msra.mxu0 0.0
  %222 = vmatprep.subr.mxu0 0.0
  %223 = vmatpush2.msra.mxu0 0.0
  %224 = vmatprep.subr.mxu0 0.0
  %225 = vmatpush2.msra.mxu0 0.0
  %226 = vmatprep.subr.mxu0 0.0
  %227 = vmatpush2.msra.mxu0 0.0
  %228 = vmatprep.mubr.f32.mxu0 0.0
  %229 = vmatmul.mubr.f32.gmra.mxu0 %v162
  %v230 = vpop.f32.mrf.mxu0
  %v231 = vadd.f32 %v42, %v230
  %v232 = vpop.f32.mrf.mxu0
  %v233 = vadd.f32 %v46, %v232
  %234 = vdwg.mxu0
  %v235 = vxor.u32 %v231, 2147483648
  %v236 = vxor.u32 %v233, 2147483648
  %v237 = vmul.f32 %v235, 1.442695
  %v238 = vpow.pop %v237
  %v239 = vmul.f32 %v236, 1.442695
  %v240 = vpow.pop %v239
  %v241 = vadd.f32 %v238, 1.0
  %v242 = vadd.f32 %v240, 1.0
  %v243 = vrcp.pop %v241
  %v244 = vmul.f32 1.0, %v243
  %v245 = vrcp.pop %v242
  %v246 = vmul.f32 1.0, %v245
  %v247 = vtanh.pop %v233
  %v248 = vmul.f32 %v244, %v147
  %250 = vrot.lane.b32.xlu0 %v247, 64
  %v251 = vpop.permute.xlu0 %250
  %v253 = vmul.f32 %v244, %v251
  %255 = vrot.lane.b32.xlu0 %v253, 64
  %v256 = vpop.permute.xlu0 %255
  %v258 = vadd.f32 %v248, %v256
  %v259 = vtanh.pop %v258
  %261 = vrot.lane.b32.xlu0 %v259, 64
  %v262 = vpop.permute.xlu0 %261
  %v264 = vmul.f32 %v246, %v262
  %s265 = scalar_lea.vmem %s0, 4
  %v266 = vld [vmem:[%s265] sm:$0x3]
  %268 = vrot.lane.b32.xlu0 %v264, 16
  %v269 = vpop.permute.xlu0 %268
  %v271 = vsel %vm36, %v266, %v269
  %v273 = vsel %vm49, %v271, 0
  %275 = vmatprep.subr.mxu0 0.0
  %276 = vmatpush1.msra.mxu0 0.0
  %277 = vmatprep.subr.mxu0 0.0
  %278 = vmatpush1.msra.mxu0 0.0
  %279 = vmatprep.subr.mxu0 0.0
  %280 = vmatpush1.msra.mxu0 0.0
  %281 = vmatprep.subr.mxu0 0.0
  %282 = vmatpush1.msra.mxu0 0.0
  %283 = vmatprep.subr.mxu0 0.0
  %284 = vmatpush1.msra.mxu0 0.0
  %285 = vmatprep.subr.mxu0 0.0
  %286 = vmatpush1.msra.mxu0 0.0
  %287 = vmatprep.subr.mxu0 %v33
  %288 = vmatpush1.msra.mxu0 %v32
  %289 = vmatprep.subr.mxu0 %v31
  %290 = vmatpush1.msra.mxu0 %v30
  %291 = vmatprep.subr.mxu0 %v29
  %292 = vmatpush1.msra.mxu0 %v28
  %293 = vmatprep.subr.mxu0 %v27
  %294 = vmatpush1.msra.mxu0 %v26
  %295 = vmatprep.subr.mxu0 %v25
  %296 = vmatpush1.msra.mxu0 %v24
  %297 = vmatprep.subr.mxu0 %v23
  %298 = vmatpush1.msra.mxu0 %v22
  %299 = vmatprep.subr.mxu0 %v21
  %300 = vmatpush1.msra.mxu0 %v20
  %301 = vmatprep.subr.mxu0 %v19
  %302 = vmatpush1.msra.mxu0 %v18
  %303 = vmatprep.subr.mxu0 %v17
  %304 = vmatpush1.msra.mxu0 %v16
  %305 = vmatprep.subr.mxu0 %v15
  %306 = vmatpush1.msra.mxu0 %v14
  %307 = vmatprep.subr.mxu0 0.0
  %308 = vmatpush2.msra.mxu0 0.0
  %309 = vmatprep.subr.mxu0 0.0
  %310 = vmatpush2.msra.mxu0 0.0
  %311 = vmatprep.subr.mxu0 0.0
  %312 = vmatpush2.msra.mxu0 0.0
  %313 = vmatprep.subr.mxu0 0.0
  %314 = vmatpush2.msra.mxu0 0.0
  %315 = vmatprep.subr.mxu0 0.0
  %316 = vmatpush2.msra.mxu0 0.0
  %317 = vmatprep.subr.mxu0 0.0
  %318 = vmatpush2.msra.mxu0 0.0
  %319 = vmatprep.subr.mxu0 0.0
  %320 = vmatpush2.msra.mxu0 0.0
  %321 = vmatprep.subr.mxu0 0.0
  %322 = vmatpush2.msra.mxu0 0.0
  %323 = vmatprep.subr.mxu0 0.0
  %324 = vmatpush2.msra.mxu0 0.0
  %325 = vmatprep.subr.mxu0 0.0
  %326 = vmatpush2.msra.mxu0 0.0
  %327 = vmatprep.subr.mxu0 0.0
  %328 = vmatpush2.msra.mxu0 0.0
  %329 = vmatprep.subr.mxu0 0.0
  %330 = vmatpush2.msra.mxu0 0.0
  %331 = vmatprep.subr.mxu0 0.0
  %332 = vmatpush2.msra.mxu0 0.0
  %333 = vmatprep.subr.mxu0 0.0
  %334 = vmatpush2.msra.mxu0 0.0
  %335 = vmatprep.subr.mxu0 0.0
  %336 = vmatpush2.msra.mxu0 0.0
  %337 = vmatprep.subr.mxu0 0.0
  %338 = vmatpush2.msra.mxu0 0.0
  %339 = vmatprep.mubr.f32.mxu0 0.0
  %340 = vmatmul.mubr.f32.gmra.mxu0 %v273
  %v341 = vpop.f32.mrf.mxu0
  %v342 = vadd.f32 %v42, %v341
  %v343 = vpop.f32.mrf.mxu0
  %v344 = vadd.f32 %v46, %v343
  %345 = vdwg.mxu0
  %v346 = vxor.u32 %v342, 2147483648
  %v347 = vxor.u32 %v344, 2147483648
  %v348 = vmul.f32 %v346, 1.442695
  %v349 = vpow.pop %v348
  %v350 = vmul.f32 %v347, 1.442695
  %v351 = vpow.pop %v350
  %v352 = vadd.f32 %v349, 1.0
  %v353 = vadd.f32 %v351, 1.0
  %v354 = vrcp.pop %v352
  %v355 = vmul.f32 1.0, %v354
  %v356 = vrcp.pop %v353
  %v357 = vmul.f32 1.0, %v356
  %v358 = vtanh.pop %v344
  %v359 = vmul.f32 %v355, %v258
  %361 = vrot.lane.b32.xlu0 %v358, 64
  %v362 = vpop.permute.xlu0 %361
  %v364 = vmul.f32 %v355, %v362
  %366 = vrot.lane.b32.xlu0 %v364, 64
  %v367 = vpop.permute.xlu0 %366
  %v369 = vadd.f32 %v359, %v367
  %v370 = vtanh.pop %v369
  %372 = vrot.lane.b32.xlu0 %v370, 64
  %v373 = vpop.permute.xlu0 %372
  %v375 = vmul.f32 %v357, %v373
  %s376 = scalar_lea.vmem %s0, 6
  %v377 = vld [vmem:[%s376] sm:$0x3]
  %379 = vrot.lane.b32.xlu0 %v375, 16
  %v380 = vpop.permute.xlu0 %379
  %v382 = vsel %vm36, %v377, %v380
  %v384 = vsel %vm49, %v382, 0
  %386 = vmatprep.subr.mxu0 0.0
  %387 = vmatpush1.msra.mxu0 0.0
  %388 = vmatprep.subr.mxu0 0.0
  %389 = vmatpush1.msra.mxu0 0.0
  %390 = vmatprep.subr.mxu0 0.0
  %391 = vmatpush1.msra.mxu0 0.0
  %392 = vmatprep.subr.mxu0 0.0
  %393 = vmatpush1.msra.mxu0 0.0
  %394 = vmatprep.subr.mxu0 0.0
  %395 = vmatpush1.msra.mxu0 0.0
  %396 = vmatprep.subr.mxu0 0.0
  %397 = vmatpush1.msra.mxu0 0.0
  %398 = vmatprep.subr.mxu0 %v33
  %399 = vmatpush1.msra.mxu0 %v32
  %400 = vmatprep.subr.mxu0 %v31
  %401 = vmatpush1.msra.mxu0 %v30
  %402 = vmatprep.subr.mxu0 %v29
  %403 = vmatpush1.msra.mxu0 %v28
  %404 = vmatprep.subr.mxu0 %v27
  %405 = vmatpush1.msra.mxu0 %v26
  %406 = vmatprep.subr.mxu0 %v25
  %407 = vmatpush1.msra.mxu0 %v24
  %408 = vmatprep.subr.mxu0 %v23
  %409 = vmatpush1.msra.mxu0 %v22
  %410 = vmatprep.subr.mxu0 %v21
  %411 = vmatpush1.msra.mxu0 %v20
  %412 = vmatprep.subr.mxu0 %v19
  %413 = vmatpush1.msra.mxu0 %v18
  %414 = vmatprep.subr.mxu0 %v17
  %415 = vmatpush1.msra.mxu0 %v16
  %416 = vmatprep.subr.mxu0 %v15
  %417 = vmatpush1.msra.mxu0 %v14
  %418 = vmatprep.subr.mxu0 0.0
  %419 = vmatpush2.msra.mxu0 0.0
  %420 = vmatprep.subr.mxu0 0.0
  %421 = vmatpush2.msra.mxu0 0.0
  %422 = vmatprep.subr.mxu0 0.0
  %423 = vmatpush2.msra.mxu0 0.0
  %424 = vmatprep.subr.mxu0 0.0
  %425 = vmatpush2.msra.mxu0 0.0
  %426 = vmatprep.subr.mxu0 0.0
  %427 = vmatpush2.msra.mxu0 0.0
  %428 = vmatprep.subr.mxu0 0.0
  %429 = vmatpush2.msra.mxu0 0.0
  %430 = vmatprep.subr.mxu0 0.0
  %431 = vmatpush2.msra.mxu0 0.0
  %432 = vmatprep.subr.mxu0 0.0
  %433 = vmatpush2.msra.mxu0 0.0
  %434 = vmatprep.subr.mxu0 0.0
  %435 = vmatpush2.msra.mxu0 0.0
  %436 = vmatprep.subr.mxu0 0.0
  %437 = vmatpush2.msra.mxu0 0.0
  %438 = vmatprep.subr.mxu0 0.0
  %439 = vmatpush2.msra.mxu0 0.0
  %440 = vmatprep.subr.mxu0 0.0
  %441 = vmatpush2.msra.mxu0 0.0
  %442 = vmatprep.subr.mxu0 0.0
  %443 = vmatpush2.msra.mxu0 0.0
  %444 = vmatprep.subr.mxu0 0.0
  %445 = vmatpush2.msra.mxu0 0.0
  %446 = vmatprep.subr.mxu0 0.0
  %447 = vmatpush2.msra.mxu0 0.0
  %448 = vmatprep.subr.mxu0 0.0
  %449 = vmatpush2.msra.mxu0 0.0
  %450 = vmatprep.mubr.f32.mxu0 0.0
  %451 = vmatmul.mubr.f32.gmra.mxu0 %v384
  %v452 = vpop.f32.mrf.mxu0
  %v453 = vadd.f32 %v42, %v452
  %v454 = vpop.f32.mrf.mxu0
  %v455 = vadd.f32 %v46, %v454
  %456 = vdwg.mxu0
  %v457 = vxor.u32 %v453, 2147483648
  %v458 = vxor.u32 %v455, 2147483648
  %v459 = vmul.f32 %v457, 1.442695
  %v460 = vpow.pop %v459
  %v461 = vmul.f32 %v458, 1.442695
  %v462 = vpow.pop %v461
  %v463 = vadd.f32 %v460, 1.0
  %v464 = vadd.f32 %v462, 1.0
  %v465 = vrcp.pop %v463
  %v466 = vmul.f32 1.0, %v465
  %v467 = vrcp.pop %v464
  %v468 = vmul.f32 1.0, %v467
  %v469 = vtanh.pop %v455
  %v470 = vmul.f32 %v466, %v369
  %472 = vrot.lane.b32.xlu0 %v469, 64
  %v473 = vpop.permute.xlu0 %472
  %v475 = vmul.f32 %v466, %v473
  %477 = vrot.lane.b32.xlu0 %v475, 64
  %v478 = vpop.permute.xlu0 %477
  %v480 = vadd.f32 %v470, %v478
  %v481 = vtanh.pop %v480
  %483 = vrot.lane.b32.xlu0 %v481, 64
  %v484 = vpop.permute.xlu0 %483
  %v486 = vmul.f32 %v468, %v484
  %s487 = scalar_lea.vmem %s0, 8
  %v488 = vld [vmem:[%s487] sm:$0x3]
  %490 = vrot.lane.b32.xlu0 %v486, 16
  %v491 = vpop.permute.xlu0 %490
  %v493 = vsel %vm36, %v488, %v491
  %v495 = vsel %vm49, %v493, 0
  %497 = vmatprep.subr.mxu0 0.0
  %498 = vmatpush1.msra.mxu0 0.0
  %499 = vmatprep.subr.mxu0 0.0
  %500 = vmatpush1.msra.mxu0 0.0
  %501 = vmatprep.subr.mxu0 0.0
  %502 = vmatpush1.msra.mxu0 0.0
  %503 = vmatprep.subr.mxu0 0.0
  %504 = vmatpush1.msra.mxu0 0.0
  %505 = vmatprep.subr.mxu0 0.0
  %506 = vmatpush1.msra.mxu0 0.0
  %507 = vmatprep.subr.mxu0 0.0
  %508 = vmatpush1.msra.mxu0 0.0
  %509 = vmatprep.subr.mxu0 %v33
  %510 = vmatpush1.msra.mxu0 %v32
  %511 = vmatprep.subr.mxu0 %v31
  %512 = vmatpush1.msra.mxu0 %v30
  %513 = vmatprep.subr.mxu0 %v29
  %514 = vmatpush1.msra.mxu0 %v28
  %515 = vmatprep.subr.mxu0 %v27
  %516 = vmatpush1.msra.mxu0 %v26
  %517 = vmatprep.subr.mxu0 %v25
  %518 = vmatpush1.msra.mxu0 %v24
  %519 = vmatprep.subr.mxu0 %v23
  %520 = vmatpush1.msra.mxu0 %v22
  %521 = vmatprep.subr.mxu0 %v21
  %522 = vmatpush1.msra.mxu0 %v20
  %523 = vmatprep.subr.mxu0 %v19
  %524 = vmatpush1.msra.mxu0 %v18
  %525 = vmatprep.subr.mxu0 %v17
  %526 = vmatpush1.msra.mxu0 %v16
  %527 = vmatprep.subr.mxu0 %v15
  %528 = vmatpush1.msra.mxu0 %v14
  %529 = vmatprep.subr.mxu0 0.0
  %530 = vmatpush2.msra.mxu0 0.0
  %531 = vmatprep.subr.mxu0 0.0
  %532 = vmatpush2.msra.mxu0 0.0
  %533 = vmatprep.subr.mxu0 0.0
  %534 = vmatpush2.msra.mxu0 0.0
  %535 = vmatprep.subr.mxu0 0.0
  %536 = vmatpush2.msra.mxu0 0.0
  %537 = vmatprep.subr.mxu0 0.0
  %538 = vmatpush2.msra.mxu0 0.0
  %539 = vmatprep.subr.mxu0 0.0
  %540 = vmatpush2.msra.mxu0 0.0
  %541 = vmatprep.subr.mxu0 0.0
  %542 = vmatpush2.msra.mxu0 0.0
  %543 = vmatprep.subr.mxu0 0.0
  %544 = vmatpush2.msra.mxu0 0.0
  %545 = vmatprep.subr.mxu0 0.0
  %546 = vmatpush2.msra.mxu0 0.0
  %547 = vmatprep.subr.mxu0 0.0
  %548 = vmatpush2.msra.mxu0 0.0
  %549 = vmatprep.subr.mxu0 0.0
  %550 = vmatpush2.msra.mxu0 0.0
  %551 = vmatprep.subr.mxu0 0.0
  %552 = vmatpush2.msra.mxu0 0.0
  %553 = vmatprep.subr.mxu0 0.0
  %554 = vmatpush2.msra.mxu0 0.0
  %555 = vmatprep.subr.mxu0 0.0
  %556 = vmatpush2.msra.mxu0 0.0
  %557 = vmatprep.subr.mxu0 0.0
  %558 = vmatpush2.msra.mxu0 0.0
  %559 = vmatprep.subr.mxu0 0.0
  %560 = vmatpush2.msra.mxu0 0.0
  %561 = vmatprep.mubr.f32.mxu0 0.0
  %562 = vmatmul.mubr.f32.gmra.mxu0 %v495
  %v563 = vpop.f32.mrf.mxu0
  %v564 = vadd.f32 %v42, %v563
  %v565 = vpop.f32.mrf.mxu0
  %v566 = vadd.f32 %v46, %v565
  %567 = vdwg.mxu0
  %v568 = vxor.u32 %v564, 2147483648
  %v569 = vxor.u32 %v566, 2147483648
  %v570 = vmul.f32 %v568, 1.442695
  %v571 = vpow.pop %v570
  %v572 = vmul.f32 %v569, 1.442695
  %v573 = vpow.pop %v572
  %v574 = vadd.f32 %v571, 1.0
  %v575 = vadd.f32 %v573, 1.0
  %v576 = vrcp.pop %v574
  %v577 = vmul.f32 1.0, %v576
  %v578 = vrcp.pop %v575
  %v579 = vmul.f32 1.0, %v578
  %v580 = vtanh.pop %v566
  %v581 = vmul.f32 %v577, %v480
  %583 = vrot.lane.b32.xlu0 %v580, 64
  %v584 = vpop.permute.xlu0 %583
  %v586 = vmul.f32 %v577, %v584
  %588 = vrot.lane.b32.xlu0 %v586, 64
  %v589 = vpop.permute.xlu0 %588
  %v591 = vadd.f32 %v581, %v589
  %v592 = vtanh.pop %v591
  %594 = vrot.lane.b32.xlu0 %v592, 64
  %v595 = vpop.permute.xlu0 %594
  %v597 = vmul.f32 %v579, %v595
  %s598 = scalar_lea.vmem %s0, 10
  %v599 = vld [vmem:[%s598] sm:$0x3]
  %601 = vrot.lane.b32.xlu0 %v597, 16
  %v602 = vpop.permute.xlu0 %601
  %v604 = vsel %vm36, %v599, %v602
  %v606 = vsel %vm49, %v604, 0
  %608 = vmatprep.subr.mxu0 0.0
  %609 = vmatpush1.msra.mxu0 0.0
  %610 = vmatprep.subr.mxu0 0.0
  %611 = vmatpush1.msra.mxu0 0.0
  %612 = vmatprep.subr.mxu0 0.0
  %613 = vmatpush1.msra.mxu0 0.0
  %614 = vmatprep.subr.mxu0 0.0
  %615 = vmatpush1.msra.mxu0 0.0
  %616 = vmatprep.subr.mxu0 0.0
  %617 = vmatpush1.msra.mxu0 0.0
  %618 = vmatprep.subr.mxu0 0.0
  %619 = vmatpush1.msra.mxu0 0.0
  %620 = vmatprep.subr.mxu0 %v33
  %621 = vmatpush1.msra.mxu0 %v32
  %622 = vmatprep.subr.mxu0 %v31
  %623 = vmatpush1.msra.mxu0 %v30
  %624 = vmatprep.subr.mxu0 %v29
  %625 = vmatpush1.msra.mxu0 %v28
  %626 = vmatprep.subr.mxu0 %v27
  %627 = vmatpush1.msra.mxu0 %v26
  %628 = vmatprep.subr.mxu0 %v25
  %629 = vmatpush1.msra.mxu0 %v24
  %630 = vmatprep.subr.mxu0 %v23
  %631 = vmatpush1.msra.mxu0 %v22
  %632 = vmatprep.subr.mxu0 %v21
  %633 = vmatpush1.msra.mxu0 %v20
  %634 = vmatprep.subr.mxu0 %v19
  %635 = vmatpush1.msra.mxu0 %v18
  %636 = vmatprep.subr.mxu0 %v17
  %637 = vmatpush1.msra.mxu0 %v16
  %638 = vmatprep.subr.mxu0 %v15
  %639 = vmatpush1.msra.mxu0 %v14
  %640 = vmatprep.subr.mxu0 0.0
  %641 = vmatpush2.msra.mxu0 0.0
  %642 = vmatprep.subr.mxu0 0.0
  %643 = vmatpush2.msra.mxu0 0.0
  %644 = vmatprep.subr.mxu0 0.0
  %645 = vmatpush2.msra.mxu0 0.0
  %646 = vmatprep.subr.mxu0 0.0
  %647 = vmatpush2.msra.mxu0 0.0
  %648 = vmatprep.subr.mxu0 0.0
  %649 = vmatpush2.msra.mxu0 0.0
  %650 = vmatprep.subr.mxu0 0.0
  %651 = vmatpush2.msra.mxu0 0.0
  %652 = vmatprep.subr.mxu0 0.0
  %653 = vmatpush2.msra.mxu0 0.0
  %654 = vmatprep.subr.mxu0 0.0
  %655 = vmatpush2.msra.mxu0 0.0
  %656 = vmatprep.subr.mxu0 0.0
  %657 = vmatpush2.msra.mxu0 0.0
  %658 = vmatprep.subr.mxu0 0.0
  %659 = vmatpush2.msra.mxu0 0.0
  %660 = vmatprep.subr.mxu0 0.0
  %661 = vmatpush2.msra.mxu0 0.0
  %662 = vmatprep.subr.mxu0 0.0
  %663 = vmatpush2.msra.mxu0 0.0
  %664 = vmatprep.subr.mxu0 0.0
  %665 = vmatpush2.msra.mxu0 0.0
  %666 = vmatprep.subr.mxu0 0.0
  %667 = vmatpush2.msra.mxu0 0.0
  %668 = vmatprep.subr.mxu0 0.0
  %669 = vmatpush2.msra.mxu0 0.0
  %670 = vmatprep.subr.mxu0 0.0
  %671 = vmatpush2.msra.mxu0 0.0
  %672 = vmatprep.mubr.f32.mxu0 0.0
  %673 = vmatmul.mubr.f32.gmra.mxu0 %v606
  %v674 = vpop.f32.mrf.mxu0
  %v675 = vadd.f32 %v42, %v674
  %v676 = vpop.f32.mrf.mxu0
  %v677 = vadd.f32 %v46, %v676
  %678 = vdwg.mxu0
  %v679 = vxor.u32 %v675, 2147483648
  %v680 = vxor.u32 %v677, 2147483648
  %v681 = vmul.f32 %v679, 1.442695
  %v682 = vpow.pop %v681
  %v683 = vmul.f32 %v680, 1.442695
  %v684 = vpow.pop %v683
  %v685 = vadd.f32 %v682, 1.0
  %v686 = vadd.f32 %v684, 1.0
  %v687 = vrcp.pop %v685
  %v688 = vmul.f32 1.0, %v687
  %v689 = vrcp.pop %v686
  %v690 = vmul.f32 1.0, %v689
  %v691 = vtanh.pop %v677
  %v692 = vmul.f32 %v688, %v591
  %694 = vrot.lane.b32.xlu0 %v691, 64
  %v695 = vpop.permute.xlu0 %694
  %v697 = vmul.f32 %v688, %v695
  %699 = vrot.lane.b32.xlu0 %v697, 64
  %v700 = vpop.permute.xlu0 %699
  %v702 = vadd.f32 %v692, %v700
  %v703 = vtanh.pop %v702
  %705 = vrot.lane.b32.xlu0 %v703, 64
  %v706 = vpop.permute.xlu0 %705
  %v708 = vmul.f32 %v690, %v706
  %s709 = scalar_lea.vmem %s0, 12
  %v710 = vld [vmem:[%s709] sm:$0x3]
  %712 = vrot.lane.b32.xlu0 %v708, 16
  %v713 = vpop.permute.xlu0 %712
  %v715 = vsel %vm36, %v710, %v713
  %v717 = vsel %vm49, %v715, 0
  %719 = vmatprep.subr.mxu0 0.0
  %720 = vmatpush1.msra.mxu0 0.0
  %721 = vmatprep.subr.mxu0 0.0
  %722 = vmatpush1.msra.mxu0 0.0
  %723 = vmatprep.subr.mxu0 0.0
  %724 = vmatpush1.msra.mxu0 0.0
  %725 = vmatprep.subr.mxu0 0.0
  %726 = vmatpush1.msra.mxu0 0.0
  %727 = vmatprep.subr.mxu0 0.0
  %728 = vmatpush1.msra.mxu0 0.0
  %729 = vmatprep.subr.mxu0 0.0
  %730 = vmatpush1.msra.mxu0 0.0
  %731 = vmatprep.subr.mxu0 %v33
  %732 = vmatpush1.msra.mxu0 %v32
  %733 = vmatprep.subr.mxu0 %v31
  %734 = vmatpush1.msra.mxu0 %v30
  %735 = vmatprep.subr.mxu0 %v29
  %736 = vmatpush1.msra.mxu0 %v28
  %737 = vmatprep.subr.mxu0 %v27
  %738 = vmatpush1.msra.mxu0 %v26
  %739 = vmatprep.subr.mxu0 %v25
  %740 = vmatpush1.msra.mxu0 %v24
  %741 = vmatprep.subr.mxu0 %v23
  %742 = vmatpush1.msra.mxu0 %v22
  %743 = vmatprep.subr.mxu0 %v21
  %744 = vmatpush1.msra.mxu0 %v20
  %745 = vmatprep.subr.mxu0 %v19
  %746 = vmatpush1.msra.mxu0 %v18
  %747 = vmatprep.subr.mxu0 %v17
  %748 = vmatpush1.msra.mxu0 %v16
  %749 = vmatprep.subr.mxu0 %v15
  %750 = vmatpush1.msra.mxu0 %v14
  %751 = vmatprep.subr.mxu0 0.0
  %752 = vmatpush2.msra.mxu0 0.0
  %753 = vmatprep.subr.mxu0 0.0
  %754 = vmatpush2.msra.mxu0 0.0
  %755 = vmatprep.subr.mxu0 0.0
  %756 = vmatpush2.msra.mxu0 0.0
  %757 = vmatprep.subr.mxu0 0.0
  %758 = vmatpush2.msra.mxu0 0.0
  %759 = vmatprep.subr.mxu0 0.0
  %760 = vmatpush2.msra.mxu0 0.0
  %761 = vmatprep.subr.mxu0 0.0
  %762 = vmatpush2.msra.mxu0 0.0
  %763 = vmatprep.subr.mxu0 0.0
  %764 = vmatpush2.msra.mxu0 0.0
  %765 = vmatprep.subr.mxu0 0.0
  %766 = vmatpush2.msra.mxu0 0.0
  %767 = vmatprep.subr.mxu0 0.0
  %768 = vmatpush2.msra.mxu0 0.0
  %769 = vmatprep.subr.mxu0 0.0
  %770 = vmatpush2.msra.mxu0 0.0
  %771 = vmatprep.subr.mxu0 0.0
  %772 = vmatpush2.msra.mxu0 0.0
  %773 = vmatprep.subr.mxu0 0.0
  %774 = vmatpush2.msra.mxu0 0.0
  %775 = vmatprep.subr.mxu0 0.0
  %776 = vmatpush2.msra.mxu0 0.0
  %777 = vmatprep.subr.mxu0 0.0
  %778 = vmatpush2.msra.mxu0 0.0
  %779 = vmatprep.subr.mxu0 0.0
  %780 = vmatpush2.msra.mxu0 0.0
  %781 = vmatprep.subr.mxu0 0.0
  %782 = vmatpush2.msra.mxu0 0.0
  %783 = vmatprep.mubr.f32.mxu0 0.0
  %784 = vmatmul.mubr.f32.gmra.mxu0 %v717
  %v785 = vpop.f32.mrf.mxu0
  %v786 = vadd.f32 %v42, %v785
  %v787 = vpop.f32.mrf.mxu0
  %v788 = vadd.f32 %v46, %v787
  %789 = vdwg.mxu0
  %v790 = vxor.u32 %v786, 2147483648
  %v791 = vxor.u32 %v788, 2147483648
  %v792 = vmul.f32 %v790, 1.442695
  %v793 = vpow.pop %v792
  %v794 = vmul.f32 %v791, 1.442695
  %v795 = vpow.pop %v794
  %v796 = vadd.f32 %v793, 1.0
  %v797 = vadd.f32 %v795, 1.0
  %v798 = vrcp.pop %v796
  %v799 = vmul.f32 1.0, %v798
  %v800 = vrcp.pop %v797
  %v801 = vmul.f32 1.0, %v800
  %v802 = vtanh.pop %v788
  %v803 = vmul.f32 %v799, %v702
  %805 = vrot.lane.b32.xlu0 %v802, 64
  %v806 = vpop.permute.xlu0 %805
  %v808 = vmul.f32 %v799, %v806
  %810 = vrot.lane.b32.xlu0 %v808, 64
  %v811 = vpop.permute.xlu0 %810
  %v813 = vadd.f32 %v803, %v811
  %v814 = vtanh.pop %v813
  %816 = vrot.lane.b32.xlu0 %v814, 64
  %v817 = vpop.permute.xlu0 %816
  %v819 = vmul.f32 %v801, %v817
  %s820 = scalar_lea.vmem %s0, 14
  %v821 = vld [vmem:[%s820] sm:$0x3]
  %823 = vrot.lane.b32.xlu0 %v819, 16
  %v824 = vpop.permute.xlu0 %823
  %v826 = vsel %vm36, %v821, %v824
  %v828 = vsel %vm49, %v826, 0
  %830 = vmatprep.subr.mxu0 0.0
  %831 = vmatpush1.msra.mxu0 0.0
  %832 = vmatprep.subr.mxu0 0.0
  %833 = vmatpush1.msra.mxu0 0.0
  %834 = vmatprep.subr.mxu0 0.0
  %835 = vmatpush1.msra.mxu0 0.0
  %836 = vmatprep.subr.mxu0 0.0
  %837 = vmatpush1.msra.mxu0 0.0
  %838 = vmatprep.subr.mxu0 0.0
  %839 = vmatpush1.msra.mxu0 0.0
  %840 = vmatprep.subr.mxu0 0.0
  %841 = vmatpush1.msra.mxu0 0.0
  %842 = vmatprep.subr.mxu0 %v33
  %843 = vmatpush1.msra.mxu0 %v32
  %844 = vmatprep.subr.mxu0 %v31
  %845 = vmatpush1.msra.mxu0 %v30
  %846 = vmatprep.subr.mxu0 %v29
  %847 = vmatpush1.msra.mxu0 %v28
  %848 = vmatprep.subr.mxu0 %v27
  %849 = vmatpush1.msra.mxu0 %v26
  %850 = vmatprep.subr.mxu0 %v25
  %851 = vmatpush1.msra.mxu0 %v24
  %852 = vmatprep.subr.mxu0 %v23
  %853 = vmatpush1.msra.mxu0 %v22
  %854 = vmatprep.subr.mxu0 %v21
  %855 = vmatpush1.msra.mxu0 %v20
  %856 = vmatprep.subr.mxu0 %v19
  %857 = vmatpush1.msra.mxu0 %v18
  %858 = vmatprep.subr.mxu0 %v17
  %859 = vmatpush1.msra.mxu0 %v16
  %860 = vmatprep.subr.mxu0 %v15
  %861 = vmatpush1.msra.mxu0 %v14
  %862 = vmatprep.subr.mxu0 0.0
  %863 = vmatpush2.msra.mxu0 0.0
  %864 = vmatprep.subr.mxu0 0.0
  %865 = vmatpush2.msra.mxu0 0.0
  %866 = vmatprep.subr.mxu0 0.0
  %867 = vmatpush2.msra.mxu0 0.0
  %868 = vmatprep.subr.mxu0 0.0
  %869 = vmatpush2.msra.mxu0 0.0
  %870 = vmatprep.subr.mxu0 0.0
  %871 = vmatpush2.msra.mxu0 0.0
  %872 = vmatprep.subr.mxu0 0.0
  %873 = vmatpush2.msra.mxu0 0.0
  %874 = vmatprep.subr.mxu0 0.0
  %875 = vmatpush2.msra.mxu0 0.0
  %876 = vmatprep.subr.mxu0 0.0
  %877 = vmatpush2.msra.mxu0 0.0
  %878 = vmatprep.subr.mxu0 0.0
  %879 = vmatpush2.msra.mxu0 0.0
  %880 = vmatprep.subr.mxu0 0.0
  %881 = vmatpush2.msra.mxu0 0.0
  %882 = vmatprep.subr.mxu0 0.0
  %883 = vmatpush2.msra.mxu0 0.0
  %884 = vmatprep.subr.mxu0 0.0
  %885 = vmatpush2.msra.mxu0 0.0
  %886 = vmatprep.subr.mxu0 0.0
  %887 = vmatpush2.msra.mxu0 0.0
  %888 = vmatprep.subr.mxu0 0.0
  %889 = vmatpush2.msra.mxu0 0.0
  %890 = vmatprep.subr.mxu0 0.0
  %891 = vmatpush2.msra.mxu0 0.0
  %892 = vmatprep.subr.mxu0 0.0
  %893 = vmatpush2.msra.mxu0 0.0
  %894 = vmatprep.mubr.f32.mxu0 0.0
  %895 = vmatmul.mubr.f32.gmra.mxu0 %v828
  %v896 = vpop.f32.mrf.mxu0
  %v897 = vadd.f32 %v42, %v896
  %v898 = vpop.f32.mrf.mxu0
  %v899 = vadd.f32 %v46, %v898
  %900 = vdwg.mxu0
  %v901 = vxor.u32 %v897, 2147483648
  %v902 = vxor.u32 %v899, 2147483648
  %v903 = vmul.f32 %v901, 1.442695
  %v904 = vpow.pop %v903
  %v905 = vmul.f32 %v902, 1.442695
  %v906 = vpow.pop %v905
  %v907 = vadd.f32 %v904, 1.0
  %v908 = vadd.f32 %v906, 1.0
  %v909 = vrcp.pop %v907
  %v910 = vmul.f32 1.0, %v909
  %v911 = vrcp.pop %v908
  %v912 = vmul.f32 1.0, %v911
  %v913 = vtanh.pop %v899
  %v914 = vmul.f32 %v910, %v813
  %916 = vrot.lane.b32.xlu0 %v913, 64
  %v917 = vpop.permute.xlu0 %916
  %v919 = vmul.f32 %v910, %v917
  %921 = vrot.lane.b32.xlu0 %v919, 64
  %v922 = vpop.permute.xlu0 %921
  %v924 = vadd.f32 %v914, %v922
  %v925 = vtanh.pop %v924
  %927 = vrot.lane.b32.xlu0 %v925, 64
  %v928 = vpop.permute.xlu0 %927
  %v930 = vmul.f32 %v912, %v928
  %vm931 = vcmask 517120
  %932 = vst.msk [vmem:[%s3] sm:$0x3] %vm931, %v930
  // Predicated region
  $region14: #{lstm_forward.1} parent=0 // pred_check
    _
  $region15: #{lstm_forward.1} parent=0 // pred_check_branch
    %934 = sbr.rel (0) target = $region17
  $region16: #{lstm_forward.1} parent=0 // pred_region
    _
  $region17: #{lstm_forward.1} parent=0 // pred_fallthru
    _
  // Predicated region
  $region18: #{lstm_forward.1} parent=0 // pred_check
    _
  $region19: #{lstm_forward.1} parent=0 // pred_check_branch
    %936 = sbr.rel (0) target = $region21
  $region20: #{lstm_forward.1} parent=0 // pred_region
    _
  $region21: #{lstm_forward.1} parent=0 // pred_fallthru
    _

</llo_original>
